<compile_context>
chip_gen: v7x
topology: tpu7x:2x2x1
jax: 0.10.0
libtpu: 0.0.40
codegen_flags: <defaults>
</compile_context>

<pallas_src>
import functools

import jax
import jax.numpy as jnp
from jax.experimental import pallas as pl
from jax.experimental.pallas import tpu as pltpu

_LANE = 128
# Batch tile for the grid path: >=512-row tiles reach ~85% of HBM roofline
# (vs ~30% at 128) and the per-tile footprint is only a few MB, well inside
# v7x's 64 MiB VMEM even with double buffering.
_BATCH_TILE = 512
# Only switch to the tiled grid once there are at least two tiles of work.
_TILED_MIN_B = 2 * _BATCH_TILE


def _round_up(n, m):
    return ((n + m - 1) // m) * m


def _policy_kernel(x_ref, w1_ref, b1_ref, w2_ref, b2_ref, o_ref, *, softmax_axis):
    """Fused Linear -> ReLU -> Linear -> softmax on one VMEM-resident block."""
    x = x_ref[...]                                      # [B, F]   f32
    w1 = w1_ref[...]                                    # [F, Hp]  f32 | bf16
    w2 = w2_ref[...]                                    # [Hp, A]  f32 | bf16

    # Matmuls on the MXU (optionally bf16 operands), accumulate in f32.
    # Bias add / ReLU / softmax stay f32 (v5e has no bf16 VPU/EUP path).
    h = jnp.dot(x.astype(w1.dtype), w1,
                preferred_element_type=jnp.float32) + b1_ref[...]
    h = jnp.maximum(h, 0.0)                             # [B, Hp] f32

    logits = jnp.dot(h.astype(w2.dtype), w2,
                     preferred_element_type=jnp.float32) + b2_ref[...]   # [B, A] f32

    m = jnp.max(logits, axis=softmax_axis, keepdims=True)
    e = jnp.exp(logits - m)
    denom = jnp.sum(e, axis=softmax_axis, keepdims=True)
    # exact reciprocal: keep sum(probs) == 1 for downstream log-prob math.
    o_ref[...] = (e * pl.reciprocal(denom, approx=False)).astype(o_ref.dtype)


def make_policy_forward(w1, b1, w2, b2, *, use_bf16_matmul=False):
    """Preprocess PyTorch-layout weights ONCE (transpose to [in, out], pad the hidden
    lane dim to a multiple of 128, lift biases to 2-D rows) and return a jitted
    `forward(x, dim=0)` closure running the fused Pallas kernel.

    Call-site guidance: stack many rollout timesteps into the batch (multiples of
    256 rows give good MXU row utilization on v6e/v7x; multiples of 128 suffice on
    v5e), or wrap the per-env-step loop in lax.scan -- dispatch cost dominates at
    single-step sizes.  On v5e, pass use_bf16_matmul=True for batched calls.
    """
    H, F = w1.shape
    A = w2.shape[0]
    H_pad = _round_up(H, _LANE)

    mm_dtype = jnp.bfloat16 if use_bf16_matmul else jnp.float32
    mm_bytes = 2 if use_bf16_matmul else 4

    # [in, out] layouts so the kernel does plain row-major x @ W (== x @ W_pt.T).
    w1_t = jnp.zeros((F, H_pad), mm_dtype).at[:, :H].set(
        jnp.asarray(w1, jnp.float32).T.astype(mm_dtype))
    b1_r = jnp.zeros((1, H_pad), jnp.float32).at[:, :H].set(
        jnp.asarray(b1, jnp.float32).reshape(1, H))
    w2_t = jnp.zeros((H_pad, A), mm_dtype).at[:H, :].set(
        jnp.asarray(w2, jnp.float32).T.astype(mm_dtype))
    b2_r = jnp.asarray(b2, jnp.float32).reshape(1, A)

    weight_bytes = (F * H_pad + H_pad * A) * mm_bytes + (H_pad + A) * 4

    def _vmem_limit(resident_rows):
        # x + out rows plus f32 temporaries (h, logits, e) per resident row, with
        # 2x headroom for double buffering / compiler scratch.  Clamp to v7x's
        # 64 MiB physical VMEM (the smallest across v5e/v6e/v7x).
        per_row = (F + A) * 4 + (2 * H_pad + 3 * A) * 4
        need = weight_bytes + resident_rows * per_row
        return int(min(max(2 * need, 4 << 20), 64 << 20))

    vmem_whole = pl.BlockSpec(memory_space=pltpu.MemorySpace.VMEM)

    @functools.partial(jax.jit, static_argnames=("dim",))
    def forward(x, dim=0):
        x = jnp.asarray(x, jnp.float32)
        squeeze = x.ndim == 1
        if squeeze:
            # torch semantics: 1-D state -> 1-D logits; softmax (dim 0 or -1) is
            # over actions, i.e. axis=1 of the internal [1, A] layout.
            x = x.reshape(1, F)
            axis = 1
        else:
            axis = dim if dim >= 0 else dim + 2          # normalize for 2-D logits
        B = x.shape[0]

        if axis == 1 and B >= _TILED_MIN_B:
            # Per-row softmax: rows are independent, so tile the batch axis.
            # Weights are pinned with a constant index_map (no re-DMA per step);
            # the batch axis is "parallel" so v7x's 2 TensorCores split the grid,
            # and per-core VMEM stays a few MB regardless of B.
            tb = _BATCH_TILE
            out = pl.pallas_call(
                functools.partial(_policy_kernel, softmax_axis=1),
                out_shape=jax.ShapeDtypeStruct((B, A), jnp.float32),
                grid=(pl.cdiv(B, tb),),
                in_specs=[
                    pl.BlockSpec((tb, F), lambda i: (i, 0)),
                    pl.BlockSpec((F, H_pad), lambda i: (0, 0)),
                    pl.BlockSpec((1, H_pad), lambda i: (0, 0)),
                    pl.BlockSpec((H_pad, A), lambda i: (0, 0)),
                    pl.BlockSpec((1, A), lambda i: (0, 0)),
                ],
                out_specs=pl.BlockSpec((tb, A), lambda i: (i, 0)),
                compiler_params=pltpu.CompilerParams(
                    dimension_semantics=("parallel",),
                    vmem_limit_bytes=_vmem_limit(2 * tb)),
            )(x, w1_t, b1_r, w2_t, b2_r)
        else:
            # Grid-less, fully VMEM-resident call: no pipeline prologue/epilogue,
            # output written directly at its true (B, A) shape (no post-kernel
            # slice HLO).
            # TODO(synk): dim=0 softmax couples the batch; beyond-VMEM B would need
            # an online-softmax grid reduction over a tiled batch axis.
            out = pl.pallas_call(
                functools.partial(_policy_kernel, softmax_axis=axis),
                out_shape=jax.ShapeDtypeStruct((B, A), jnp.float32),
                in_specs=[vmem_whole] * 5,
                out_specs=vmem_whole,
                compiler_params=pltpu.CompilerParams(
                    vmem_limit_bytes=_vmem_limit(B)),
            )(x, w1_t, b1_r, w2_t, b2_r)

        return out[0] if squeeze else out

    return forward


def _init_linear(key, out_dim, in_dim):
    """Deterministic init mirroring nn.Linear's U(-1/sqrt(fan_in), 1/sqrt(fan_in))."""
    kw, kb = jax.random.split(key)
    bound = 1.0 / jnp.sqrt(jnp.float32(in_dim))
    w = jax.random.uniform(kw, (out_dim, in_dim), jnp.float32, -bound, bound)
    b = jax.random.uniform(kb, (out_dim,), jnp.float32, -bound, bound)
    return w, b


def _reference(x, w1, b1, w2, b2, dim):
    h = jnp.maximum(x @ w1.T + b1, 0.0)
    return jax.nn.softmax(h @ w2.T + b2, axis=dim)


if __name__ == "__main__":
    key = jax.random.PRNGKey(0)
    k_x, k_xb, k_xt, k_l1, k_l2 = jax.random.split(key, 5)

    # Policy(input_shape=32, n_actions=8, hidden_dim=128)
    B, F, H, A = 8, 32, 128, 8
    w1, b1 = _init_linear(k_l1, H, F)   # Linear(input_shape, hidden_dim)
    w2, b2 = _init_linear(k_l2, A, H)   # Linear(hidden_dim, n_actions)

    # Weight preprocessing happens exactly once here and is reused by every call.
    forward = make_policy_forward(w1, b1, w2, b2)

    # (1) module default: softmax over dim=0 at the small shape (grid-less path).
    x = jax.random.normal(k_x, (B, F), jnp.float32)
    out = jax.block_until_ready(forward(x, dim=0))
    assert out.shape == (B, A)
    assert jnp.allclose(out, _reference(x, w1, b1, w2, b2, 0),
                        atol=1e-5, rtol=1e-5), "dim=0 mismatch vs reference"

    # (2) per-sample softmax (dim=-1), small batch (grid-less path).
    out1 = jax.block_until_ready(forward(x, dim=-1))
    assert jnp.allclose(out1, _reference(x, w1, b1, w2, b2, -1),
                        atol=1e-5, rtol=1e-5), "dim=-1 mismatch vs reference"

    # (3) single 1-D state (typical REINFORCE action-selection call).
    outs = jax.block_until_ready(forward(x[0], dim=0))
    assert outs.shape == (A,)
    assert jnp.allclose(outs, _reference(x[:1], w1, b1, w2, b2, -1)[0],
                        atol=1e-5, rtol=1e-5), "1-D state mismatch vs reference"

    # (4) batched dim=0 call (whole array VMEM-resident; B multiple of 256 for MXU).
    xb = jax.random.normal(k_xb, (256, F), jnp.float32)
    outb = jax.block_until_ready(forward(xb, dim=0))
    assert outb.shape == (256, A)
    assert jnp.allclose(outb, _reference(xb, w1, b1, w2, b2, 0),
                        atol=1e-5, rtol=1e-5), "batched dim=0 mismatch vs reference"

    # (5) large-batch dim=-1 call exercises the batch-tiled "parallel" grid path
    #     (4 tiles of 512 rows; weights stay resident via constant index_map).
    xt = jax.random.normal(k_xt, (2048, F), jnp.float32)
    outt = jax.block_until_ready(forward(xt, dim=-1))
    assert outt.shape == (2048, A)
    assert jnp.allclose(outt, _reference(xt, w1, b1, w2, b2, -1),
                        atol=1e-5, rtol=1e-5), "tiled dim=-1 mismatch vs reference"

    # (6) bf16-matmul variant (recommended for batched calls on v5e); relaxed tols
    #     because bf16 operand rounding is expected, not a bug.
    forward_bf16 = make_policy_forward(w1, b1, w2, b2, use_bf16_matmul=True)
    outbf = jax.block_until_ready(forward_bf16(xb, dim=-1))
    assert jnp.allclose(outbf, _reference(xb, w1, b1, w2, b2, -1),
                        atol=2e-2, rtol=2e-2), "bf16 path mismatch vs reference"

    print("KERNEL_OK")
</pallas_src>

<mosaic_0001>
module attributes {stable_mosaic.version = 11 : i64} {
  func.func @_policy_kernel(%arg0: memref<8x32xf32, #tpu.memory_space<vmem>>, %arg1: memref<32x128xf32, #tpu.memory_space<vmem>>, %arg2: memref<1x128xf32, #tpu.memory_space<vmem>>, %arg3: memref<128x8xf32, #tpu.memory_space<vmem>>, %arg4: memref<1x8xf32, #tpu.memory_space<vmem>>, %arg5: memref<8x8xf32, #tpu.memory_space<vmem>>) attributes {dimension_semantics = [], scalar_prefetch = 0 : i64, scratch_operands = 0 : i64, tpu.core_type = #tpu.core_type<tc>} {
    %c0 = arith.constant 0 : index
    %c0_0 = arith.constant 0 : index
    %0 = vector.load %arg0[%c0, %c0_0] : memref<8x32xf32, #tpu.memory_space<vmem>>, vector<8x32xf32>
    %c0_1 = arith.constant 0 : index
    %c0_2 = arith.constant 0 : index
    %1 = vector.load %arg1[%c0_1, %c0_2] : memref<32x128xf32, #tpu.memory_space<vmem>>, vector<32x128xf32>
    %c0_3 = arith.constant 0 : index
    %c0_4 = arith.constant 0 : index
    %2 = vector.load %arg3[%c0_3, %c0_4] : memref<128x8xf32, #tpu.memory_space<vmem>>, vector<128x8xf32>
    %cst = arith.constant dense<0.000000e+00> : vector<8x128xf32>
    %3 = tpu.matmul %0, %1, %cst {dimension_numbers = #tpu.dot_dimension_numbers<[1], [0], [0], [1], [0, 0, 1, 1], [], []>} : vector<8x32xf32>, vector<32x128xf32>, vector<8x128xf32> -> vector<8x128xf32>
    %c0_5 = arith.constant 0 : index
    %c0_6 = arith.constant 0 : index
    %4 = vector.load %arg2[%c0_5, %c0_6] : memref<1x128xf32, #tpu.memory_space<vmem>>, vector<1x128xf32>
    %5 = vector.broadcast %4 : vector<1x128xf32> to vector<8x128xf32>
    %6 = arith.addf %3, %5 : vector<8x128xf32>
    %cst_7 = arith.constant 0.000000e+00 : f32
    %7 = vector.broadcast %cst_7 : f32 to vector<8x128xf32>
    %8 = arith.maximumf %6, %7 : vector<8x128xf32>
    %cst_8 = arith.constant dense<0.000000e+00> : vector<8x8xf32>
    %9 = tpu.matmul %8, %2, %cst_8 {dimension_numbers = #tpu.dot_dimension_numbers<[1], [0], [0], [1], [0, 0, 1, 1], [], []>} : vector<8x128xf32>, vector<128x8xf32>, vector<8x8xf32> -> vector<8x8xf32>
    %c0_9 = arith.constant 0 : index
    %c0_10 = arith.constant 0 : index
    %10 = vector.load %arg4[%c0_9, %c0_10] : memref<1x8xf32, #tpu.memory_space<vmem>>, vector<1x8xf32>
    %11 = vector.broadcast %10 : vector<1x8xf32> to vector<8x8xf32>
    %12 = arith.addf %9, %11 : vector<8x8xf32>
    %cst_11 = arith.constant dense<0xFF800000> : vector<8xf32>
    %13 = vector.multi_reduction <maximumf>, %12, %cst_11 [0] : vector<8x8xf32> to vector<8xf32>
    %14 = vector.shape_cast %13 : vector<8xf32> to vector<1x8xf32>
    %15 = vector.broadcast %14 : vector<1x8xf32> to vector<8x8xf32>
    %16 = arith.subf %12, %15 : vector<8x8xf32>
    %17 = math.exp %16 : vector<8x8xf32>
    %cst_12 = arith.constant dense<0.000000e+00> : vector<8xf32>
    %18 = vector.multi_reduction <add>, %17, %cst_12 [0] : vector<8x8xf32> to vector<8xf32>
    %19 = vector.shape_cast %18 : vector<8xf32> to vector<1x8xf32>
    %20 = tpu.reciprocal %19 : vector<1x8xf32> -> vector<1x8xf32>
    %21 = vector.broadcast %20 : vector<1x8xf32> to vector<8x8xf32>
    %22 = arith.mulf %17, %21 : vector<8x8xf32>
    %c0_13 = arith.constant 0 : index
    %c0_14 = arith.constant 0 : index
    %23 = vector.load %arg5[%c0_13, %c0_14] : memref<8x8xf32, #tpu.memory_space<vmem>>, vector<8x8xf32>
    tpu.vector_store %arg5[%c0_13, %c0_14], %22 {strides = array<i32>} : memref<8x8xf32, #tpu.memory_space<vmem>>, vector<8x8xf32>,
    return
  }
}

</mosaic_0001>

<llo_original>
// kernel: forward.1
$region0: #{forward.1}
  #allocation0 [shape = 'u32[]', space=smem, size = 0x4, offset = 0x4, fixed_abs, tag = 'smem constant byte address 0x4 - core index']
  #allocation1 [shape = 'u32[144,128]{1,0:T(1,128)}', space=vmem, size = 0x12000, scoped, tag = 'internal scratch']
  %s0 = inlined_call_operand.hbm [shape: f32[8,32], index: 0, kind: input, shape index: {}]
  %s1 = inlined_call_operand.hbm [shape: f32[32,128], index: 1, kind: input, shape index: {}]
  %s2 = inlined_call_operand.vmem [shape: f32[1,128], index: 2, kind: input, shape index: {}]
  %s3 = inlined_call_operand.hbm [shape: f32[128,8], index: 3, kind: input, shape index: {}]
  %s4 = inlined_call_operand.vmem [shape: f32[1,8], index: 4, kind: input, shape index: {}]
  %s5 = inlined_call_operand.hbm [shape: f32[8,8], index: 5, kind: output, shape index: {}]
  %s6 = sld [smem:[#allocation0]]
  $region42: #{forward.1} parent=0
    _
  %s8 = ssub.s32 1, %s6
  %s9 = scalar_select 0, %s8, %s6
  $region1: #{forward.1} parent=0
    #allocation2 [shape = 'u8[4096]{0}', space=vmem, size = 0x1000, scoped, tag = 'input window, operand 0, single buffered']
    #allocation3 [shape = 's32[1]{0}', space=sflag, size = 0x4, scoped, tag = 'scoped memory for forward.1']
    #allocation4 [shape = 's32[1]{0}', space=sflag, size = 0x4, scoped, tag = 'scoped memory for forward.1']
    #allocation5 [shape = 'u8[16384]{0}', space=vmem, size = 0x4000, scoped, tag = 'input window, operand 1, single buffered']
    #allocation6 [shape = 's32[1]{0}', space=sflag, size = 0x4, scoped, tag = 'scoped memory for forward.1']
    #allocation7 [shape = 'u8[65536]{0}', space=vmem, size = 0x10000, scoped, tag = 'input window, operand 3, single buffered']
    #allocation8 [shape = 'u8[4096]{0}', space=vmem, size = 0x1000, scoped, tag = 'output window, operand 0, single buffered']
    %10 = vsyncpa [#allocation3], 0
    %11 = vsyncpa [#allocation6], 0
    %12 = vsyncpa [#allocation4], 0
    // Predicated region
    $region2: #{forward.1} parent=1 // pred_check
      _
    $region3: #{forward.1} parent=1 // pred_check_branch
      %14 = sbr.rel (0) target = $region5
    $region4: #{forward.1} parent=1 // pred_region
      %s16 = ssub.s32 128, 128
      %17 = vsyncadd [#allocation3], %s16
      %s19 = sshll.u32 [#allocation2], 4
      %s20 = int_to_ptr.vmem [resolvable:$true] %s19
      %22 = dma.hbm_to_vmem [thread:$0]  %s0, 128, %s20, [#allocation3]
    $region5: #{forward.1} parent=1 // pred_fallthru
      _
    // Predicated region
    $region6: #{forward.1} parent=1 // pred_check
      _
    $region7: #{forward.1} parent=1 // pred_check_branch
      %24 = sbr.rel (0) target = $region9
    $region8: #{forward.1} parent=1 // pred_region
      %s26 = ssub.s32 512, 512
      %27 = vsyncadd [#allocation6], %s26
      %s28 = sshll.u32 [#allocation5], 4
      %s29 = int_to_ptr.vmem [resolvable:$true] %s28
      %34 = dma.hbm_to_vmem [thread:$0]  %s1, 512, %s29, [#allocation6], 128, 128, 8
    $region9: #{forward.1} parent=1 // pred_fallthru
      _
    // Predicated region
    $region10: #{forward.1} parent=1 // pred_check
      _
    $region11: #{forward.1} parent=1 // pred_check_branch
      %36 = sbr.rel (0) target = $region13
    $region12: #{forward.1} parent=1 // pred_region
      _
    $region13: #{forward.1} parent=1 // pred_fallthru
      _
    // Predicated region
    $region14: #{forward.1} parent=1 // pred_check
      _
    $region15: #{forward.1} parent=1 // pred_check_branch
      %38 = sbr.rel (0) target = $region17
    $region16: #{forward.1} parent=1 // pred_region
      %s40 = ssub.s32 2048, 2048
      %41 = vsyncadd [#allocation6], %s40
      %s42 = sshll.u32 [#allocation7], 4
      %s43 = int_to_ptr.vmem [resolvable:$true] %s42
      %48 = dma.hbm_to_vmem [thread:$0]  %s3, 2048, %s43, [#allocation6], 128, 128, 8
    $region17: #{forward.1} parent=1 // pred_fallthru
      _
    // Predicated region
    $region18: #{forward.1} parent=1 // pred_check
      _
    $region19: #{forward.1} parent=1 // pred_check_branch
      %50 = sbr.rel (0) target = $region21
    $region20: #{forward.1} parent=1 // pred_region
      _
    $region21: #{forward.1} parent=1 // pred_fallthru
      _
    // Predicated region
    $region22: #{forward.1} parent=1 // pred_check
      _
    $region23: #{forward.1} parent=1 // pred_check_branch
      %52 = sbr.rel (0) target = $region25
    $region24: #{forward.1} parent=1 // pred_region
      %53 = dma.done [#allocation3], 128
    $region25: #{forward.1} parent=1 // pred_fallthru
      _
    // Predicated region
    $region26: #{forward.1} parent=1 // pred_check
      _
    $region27: #{forward.1} parent=1 // pred_check_branch
      %55 = sbr.rel (0) target = $region29
    $region28: #{forward.1} parent=1 // pred_region
      %56 = dma.done [#allocation6], 512
    $region29: #{forward.1} parent=1 // pred_fallthru
      _
    // Predicated region
    $region30: #{forward.1} parent=1 // pred_check
      _
    $region31: #{forward.1} parent=1 // pred_check_branch
      %58 = sbr.rel (0) target = $region33
    $region32: #{forward.1} parent=1 // pred_region
      %59 = dma.done [#allocation6], 2048
    $region33: #{forward.1} parent=1 // pred_fallthru
      _
    %v60 = vld [vmem:[#allocation2] sm:$0xff]
    %v61 = vld [vmem:[#allocation5] sm:$0xff]
    %v62 = vld [vmem:[#allocation5 + $0x8] sm:$0xff]
    %v63 = vld [vmem:[#allocation5 + $0x10] sm:$0xff]
    %v64 = vld [vmem:[#allocation5 + $0x18] sm:$0xff]
    %v65 = vld [vmem:[#allocation7] sm:$0xff]
    %v66 = vld [vmem:[#allocation7 + $0x8] sm:$0xff]
    %v67 = vld [vmem:[#allocation7 + $0x10] sm:$0xff]
    %v68 = vld [vmem:[#allocation7 + $0x18] sm:$0xff]
    %v69 = vld [vmem:[#allocation7 + $0x20] sm:$0xff]
    %v70 = vld [vmem:[#allocation7 + $0x28] sm:$0xff]
    %v71 = vld [vmem:[#allocation7 + $0x30] sm:$0xff]
    %v72 = vld [vmem:[#allocation7 + $0x38] sm:$0xff]
    %v73 = vld [vmem:[#allocation7 + $0x40] sm:$0xff]
    %v74 = vld [vmem:[#allocation7 + $0x48] sm:$0xff]
    %v75 = vld [vmem:[#allocation7 + $0x50] sm:$0xff]
    %v76 = vld [vmem:[#allocation7 + $0x58] sm:$0xff]
    %v77 = vld [vmem:[#allocation7 + $0x60] sm:$0xff]
    %v78 = vld [vmem:[#allocation7 + $0x68] sm:$0xff]
    %v79 = vld [vmem:[#allocation7 + $0x70] sm:$0xff]
    %v80 = vld [vmem:[#allocation7 + $0x78] sm:$0xff]
    %v81 = vld [vmem:[%s2] sm:$0x1]
    %v83 = vlaneseq
    %v84 = vshrl.u32 %v83, 7
    %v85 = vsub.s32 0, %v84
    %v86 = vrot.slane %v81, %v85
    %vm88 = vcmask 261120
    %v90 = vsel %vm88, %v60, 0
    %92 = vmatprep.subr.mxu0 0.0
    %93 = vmatpush1.msra.mxu0 %v61
    %94 = vmatprep.subr.mxu0 0.0
    %95 = vmatpush1.msra.mxu0 %v62
    %96 = vmatprep.subr.mxu0 0.0
    %97 = vmatpush1.msra.mxu0 %v63
    %98 = vmatprep.subr.mxu0 0.0
    %99 = vmatpush1.msra.mxu0 %v64
    %100 = vmatprep.subr.mxu0 0.0
    %101 = vmatpush1.msra.mxu0 0.0
    %102 = vmatprep.subr.mxu0 0.0
    %103 = vmatpush1.msra.mxu0 0.0
    %104 = vmatprep.subr.mxu0 0.0
    %105 = vmatpush1.msra.mxu0 0.0
    %106 = vmatprep.subr.mxu0 0.0
    %107 = vmatpush1.msra.mxu0 0.0
    %108 = vmatprep.subr.mxu0 0.0
    %109 = vmatpush1.msra.mxu0 0.0
    %110 = vmatprep.subr.mxu0 0.0
    %111 = vmatpush1.msra.mxu0 0.0
    %112 = vmatprep.subr.mxu0 0.0
    %113 = vmatpush1.msra.mxu0 0.0
    %114 = vmatprep.subr.mxu0 0.0
    %115 = vmatpush1.msra.mxu0 0.0
    %116 = vmatprep.subr.mxu0 0.0
    %117 = vmatpush1.msra.mxu0 0.0
    %118 = vmatprep.subr.mxu0 0.0
    %119 = vmatpush1.msra.mxu0 0.0
    %120 = vmatprep.subr.mxu0 0.0
    %121 = vmatpush1.msra.mxu0 0.0
    %122 = vmatprep.subr.mxu0 0.0
    %123 = vmatpush1.msra.mxu0 0.0
    %124 = vmatprep.subr.mxu0 0.0
    %125 = vmatpush1.msra.mxu0 0.0
    %126 = vmatprep.subr.mxu0 0.0
    %127 = vmatpush1.msra.mxu0 0.0
    %128 = vmatprep.subr.mxu0 0.0
    %129 = vmatpush1.msra.mxu0 0.0
    %130 = vmatprep.subr.mxu0 0.0
    %131 = vmatpush1.msra.mxu0 0.0
    %132 = vmatprep.subr.mxu0 0.0
    %133 = vmatpush1.msra.mxu0 0.0
    %134 = vmatprep.subr.mxu0 0.0
    %135 = vmatpush1.msra.mxu0 0.0
    %136 = vmatprep.subr.mxu0 0.0
    %137 = vmatpush1.msra.mxu0 0.0
    %138 = vmatprep.subr.mxu0 0.0
    %139 = vmatpush1.msra.mxu0 0.0
    %140 = vmatprep.subr.mxu0 0.0
    %141 = vmatpush1.msra.mxu0 0.0
    %142 = vmatprep.subr.mxu0 0.0
    %143 = vmatpush1.msra.mxu0 0.0
    %144 = vmatprep.subr.mxu0 0.0
    %145 = vmatpush1.msra.mxu0 0.0
    %146 = vmatprep.subr.mxu0 0.0
    %147 = vmatpush1.msra.mxu0 0.0
    %148 = vmatprep.subr.mxu0 0.0
    %149 = vmatpush1.msra.mxu0 0.0
    %150 = vmatprep.subr.mxu0 0.0
    %151 = vmatpush1.msra.mxu0 0.0
    %152 = vmatprep.subr.mxu0 0.0
    %153 = vmatpush1.msra.mxu0 0.0
    %154 = vmatprep.subr.mxu0 0.0
    %155 = vmatpush1.msra.mxu0 0.0
    %156 = vmatprep.mubr.f32.mxu0 0.0
    %157 = vmatmul.mubr.f32.gmra.mrb[0].mxu0 %v90
    %v158 = vpop.f32.mrb[0].mxu0
    %v159 = vadd.f32 %v86, %v158
    %v160 = vpop.f32.mrb[0].mxu0
    %161 = vdwg.mxu0
    %v162 = vmax.f32 %v159, 0.0
    %v163 = vld [vmem:[%s4] sm:$0x1]
    %v165 = vlaneseq
    %v166 = vshrl.u32 %v165, 7
    %v167 = vsub.s32 0, %v166
    %v168 = vrot.slane %v163, %v167
    %170 = vmatprep.subr.mxu0 0.0
    %171 = vmatpush1.msra.mxu0 %v65
    %172 = vmatprep.subr.mxu0 0.0
    %173 = vmatpush1.msra.mxu0 %v66
    %174 = vmatprep.subr.mxu0 0.0
    %175 = vmatpush1.msra.mxu0 %v67
    %176 = vmatprep.subr.mxu0 0.0
    %177 = vmatpush1.msra.mxu0 %v68
    %178 = vmatprep.subr.mxu0 0.0
    %179 = vmatpush1.msra.mxu0 %v69
    %180 = vmatprep.subr.mxu0 0.0
    %181 = vmatpush1.msra.mxu0 %v70
    %182 = vmatprep.subr.mxu0 0.0
    %183 = vmatpush1.msra.mxu0 %v71
    %184 = vmatprep.subr.mxu0 0.0
    %185 = vmatpush1.msra.mxu0 %v72
    %186 = vmatprep.subr.mxu0 0.0
    %187 = vmatpush1.msra.mxu0 %v73
    %188 = vmatprep.subr.mxu0 0.0
    %189 = vmatpush1.msra.mxu0 %v74
    %190 = vmatprep.subr.mxu0 0.0
    %191 = vmatpush1.msra.mxu0 %v75
    %192 = vmatprep.subr.mxu0 0.0
    %193 = vmatpush1.msra.mxu0 %v76
    %194 = vmatprep.subr.mxu0 0.0
    %195 = vmatpush1.msra.mxu0 %v77
    %196 = vmatprep.subr.mxu0 0.0
    %197 = vmatpush1.msra.mxu0 %v78
    %198 = vmatprep.subr.mxu0 0.0
    %199 = vmatpush1.msra.mxu0 %v79
    %200 = vmatprep.subr.mxu0 0.0
    %201 = vmatpush1.msra.mxu0 %v80
    %202 = vmatprep.subr.mxu0 0.0
    %203 = vmatpush1.msra.mxu0 0.0
    %204 = vmatprep.subr.mxu0 0.0
    %205 = vmatpush1.msra.mxu0 0.0
    %206 = vmatprep.subr.mxu0 0.0
    %207 = vmatpush1.msra.mxu0 0.0
    %208 = vmatprep.subr.mxu0 0.0
    %209 = vmatpush1.msra.mxu0 0.0
    %210 = vmatprep.subr.mxu0 0.0
    %211 = vmatpush1.msra.mxu0 0.0
    %212 = vmatprep.subr.mxu0 0.0
    %213 = vmatpush1.msra.mxu0 0.0
    %214 = vmatprep.subr.mxu0 0.0
    %215 = vmatpush1.msra.mxu0 0.0
    %216 = vmatprep.subr.mxu0 0.0
    %217 = vmatpush1.msra.mxu0 0.0
    %218 = vmatprep.subr.mxu0 0.0
    %219 = vmatpush1.msra.mxu0 0.0
    %220 = vmatprep.subr.mxu0 0.0
    %221 = vmatpush1.msra.mxu0 0.0
    %222 = vmatprep.subr.mxu0 0.0
    %223 = vmatpush1.msra.mxu0 0.0
    %224 = vmatprep.subr.mxu0 0.0
    %225 = vmatpush1.msra.mxu0 0.0
    %226 = vmatprep.subr.mxu0 0.0
    %227 = vmatpush1.msra.mxu0 0.0
    %228 = vmatprep.subr.mxu0 0.0
    %229 = vmatpush1.msra.mxu0 0.0
    %230 = vmatprep.subr.mxu0 0.0
    %231 = vmatpush1.msra.mxu0 0.0
    %232 = vmatprep.subr.mxu0 0.0
    %233 = vmatpush1.msra.mxu0 0.0
    %234 = vmatprep.mubr.f32.mxu0 0.0
    %235 = vmatmul.mubr.f32.gmra.mrb[0].mxu0 %v162
    %v236 = vpop.f32.mrb[0].mxu0
    %v237 = vadd.f32 %v168, %v236
    %v238 = vpop.f32.mrb[0].mxu0
    %239 = vdwg.mxu0
    %vm240 = vcmask 64512
    %v241 = vsel %vm240, %v237, -inf
    %v242 = vrot.slane %v241, 4
    %v243 = vmax.f32 %v241, %v242
    %v244 = vrot.slane %v243, 2
    %v245 = vmax.f32 %v243, %v244
    %v246 = vrot.slane %v245, 1
    %v247 = vmax.f32 %v245, %v246
    %v248 = vsub.f32 %v237, %v247
    %v249 = vmul.f32 %v248, 1.442695
    %v250 = vpow.pop %v249
    %v251 = vsel %vm240, %v250, 0.0
    %v252 = vrot.slane %v251, 4
    %v253 = vadd.f32 %v251, %v252
    %v254 = vrot.slane %v253, 2
    %v255 = vadd.f32 %v253, %v254
    %v256 = vrot.slane %v255, 1
    %v257 = vadd.f32 %v255, %v256
    %v258 = vrcp.pop %v257
    %v259 = vmul.f32 %v250, %v258
    %260 = vst.msk [vmem:[#allocation8] sm:$0xff] %vm240, %v259
    // Predicated region
    $region34: #{forward.1} parent=1 // pred_check
      _
    $region35: #{forward.1} parent=1 // pred_check_branch
      %262 = sbr.rel (0) target = $region37
    $region36: #{forward.1} parent=1 // pred_region
      %s264 = ssub.s32 128, 128
      %265 = vsyncadd [#allocation4], %s264
      %s267 = sshll.u32 [#allocation8], 4
      %s268 = int_to_ptr.vmem [resolvable:$true] %s267
      %270 = dma.vmem_to_hbm [thread:$0]  %s268, 128, %s5, [#allocation4]
    $region37: #{forward.1} parent=1 // pred_fallthru
      _
    // Predicated region
    $region38: #{forward.1} parent=1 // pred_check
      _
    $region39: #{forward.1} parent=1 // pred_check_branch
      %272 = sbr.rel (0) target = $region41
    $region40: #{forward.1} parent=1 // pred_region
      %273 = dma.done [#allocation4], 128
    $region41: #{forward.1} parent=1 // pred_fallthru
      _
    %274 = vsyncpa [#allocation3], 1
    %275 = vsyncpa [#allocation6], 1
    %276 = vsyncpa [#allocation4], 1

</llo_original>
